<compile_context>
chip_gen: v5e
topology: v5e:2x2
jax: 0.10.0
libtpu: 0.0.40
codegen_flags: <defaults>
</compile_context>

<pallas_src>
import functools
import math

import jax
import jax.numpy as jnp
from jax import lax
from jax.experimental import pallas as pl
from jax.experimental.pallas import tpu as pltpu


def _hard_dice_kernel(x_ref, t_ref, inter_ref, denom_ref, *,
                      logit_thr, rows, tn, m, k_per, need_mask):
    c = pl.program_id(0)          # feature-chunk axis ("parallel")
    k = pl.program_id(1)          # tile axis within the chunk ("arbitrary")

    @pl.when(k == 0)
    def _():
        inter_ref[...] = jnp.zeros_like(inter_ref)
        denom_ref[...] = jnp.zeros_like(denom_ref)

    x = x_ref[...].astype(jnp.float32)      # (rows, tn) logits
    t = t_ref[...].astype(jnp.float32)      # (rows, tn) targets

    if need_mask:
        # Ragged tail / over-allocated chunk tiles: zero out invalid lanes.
        tile_idx = c * k_per + k            # un-clamped logical tile index
        col = tile_idx * tn + lax.broadcasted_iota(jnp.int32, (rows, tn), 1)
        valid = col < m
        preds = jnp.logical_and(valid, x > logit_thr).astype(jnp.float32)
        trues = jnp.where(valid, t, 0.0)
    else:
        # Hard binarization == logit-space compare (sigmoid is monotonic).
        preds = (x > logit_thr).astype(jnp.float32)
        trues = t

    inter_ref[...] += jnp.sum(preds * trues, axis=1, keepdims=True)
    denom_ref[...] += jnp.sum(preds + trues, axis=1, keepdims=True)


def hard_dice_coef(inputs, target, class_id=None, threshold=0.5, smooth=0.001,
                   tile_n=8192, num_chunks=2):
    """JAX/Pallas equivalent of HardDiceCoef.forward(inputs, target)."""
    if class_id is not None:
        inputs = inputs[:, class_id]
        target = target[:, class_id]

    if target.dtype == jnp.bool_:
        target = target.astype(jnp.int8)    # keep DMA bytes small; cast in-kernel

    B = inputs.shape[0]
    x = jnp.reshape(inputs, (B, -1))
    t = jnp.reshape(target, (B, -1))
    N = x.shape[1]

    # Fill vreg sublanes when the batch is small: (B, N) -> (B*R, N/R)
    # (a free, contiguous reshape; per-sample groups of R rows are summed
    #  back together in the wrapper).
    R = 1
    if B < 8:
        need = (8 + B - 1) // B
        for r in (2, 4, 8):
            if r >= need and N % r == 0:
                R = r
                break
    rows = B * R
    M = N // R
    x = jnp.reshape(x, (rows, M))
    t = jnp.reshape(t, (rows, M))

    # Lane-tile size: as large as possible while keeping the double-buffered
    # input tiles comfortably inside scoped VMEM on every generation
    # (v7x: 64 MiB physical / 32 MiB default scoped).
    budget = 12 * 1024 * 1024
    bytes_per_lane = rows * (x.dtype.itemsize + t.dtype.itemsize)
    max_tn = max(128, budget // (2 * bytes_per_lane))
    tn = min(int(tile_n), max_tn)
    tn = max(128, (tn // 128) * 128)
    if tn >= M:
        tn = M                               # full-dim block (always legal)
    k_total = pl.cdiv(M, tn)

    # Leading "parallel" axis -> both TensorCores stream HBM on v7x
    # (harmless on single-TC v5e/v6e).
    C = max(1, min(int(num_chunks), k_total))
    k_per = pl.cdiv(k_total, C)

    need_mask = (M % tn != 0) or (k_total != C * k_per)

    thr = min(max(float(threshold), 1e-7), 1.0 - 1e-7)
    logit_thr = math.log(thr / (1.0 - thr))

    def in_index_map(c, k):
        # Clamp so tiles past the end (possible only when k_total % C != 0)
        # re-read the last in-bounds block; their contribution is masked out.
        return (0, jnp.minimum(c * k_per + k, k_total - 1))

    kernel = functools.partial(
        _hard_dice_kernel,
        logit_thr=logit_thr, rows=rows, tn=tn, m=M, k_per=k_per,
        need_mask=need_mask)

    inter_p, denom_p = pl.pallas_call(
        kernel,
        out_shape=(jax.ShapeDtypeStruct((C, rows, 1), jnp.float32),
                   jax.ShapeDtypeStruct((C, rows, 1), jnp.float32)),
        grid=(C, k_per),
        in_specs=[
            pl.BlockSpec((rows, tn), in_index_map),
            pl.BlockSpec((rows, tn), in_index_map),
        ],
        out_specs=(
            pl.BlockSpec((None, rows, 1), lambda c, k: (c, 0, 0)),
            pl.BlockSpec((None, rows, 1), lambda c, k: (c, 0, 0)),
        ),
        compiler_params=pltpu.CompilerParams(
            dimension_semantics=("parallel", "arbitrary"),
            vmem_limit_bytes=32 * 1024 * 1024),
    )(x, t)

    # Tiny final combine (O(B) scalars) in plain JAX.
    inter = jnp.sum(jnp.reshape(inter_p, (C, B, R)), axis=(0, 2))   # (B,)
    denom = jnp.sum(jnp.reshape(denom_p, (C, B, R)), axis=(0, 2))   # (B,)
    dice = jnp.mean((2.0 * inter + smooth) / (denom + smooth))
    return dice


def _reference_hard_dice(inputs, target, class_id=None, threshold=0.5,
                         smooth=0.001):
    if class_id is not None:
        inputs = inputs[:, class_id]
        target = target[:, class_id]
    B = inputs.shape[0]
    preds = (jax.nn.sigmoid(inputs.astype(jnp.float32)) > threshold)
    preds = preds.astype(jnp.float32).reshape(B, -1)
    trues = target.astype(jnp.float32).reshape(B, -1)
    inter = jnp.sum(preds * trues, axis=1)
    return jnp.mean((2.0 * inter + smooth) /
                    (preds.sum(axis=1) + trues.sum(axis=1) + smooth))


if __name__ == "__main__":
    key = jax.random.PRNGKey(0)
    k1, k2, k3, k4 = jax.random.split(key, 4)

    # Case 1: module defaults (class_id=None, threshold=0.5), B=2, C=4, 16x16.
    B, Cc, H, W = 2, 4, 16, 16
    inputs = jax.random.normal(k1, (B, Cc, H, W), dtype=jnp.float32)
    target = (jax.random.uniform(k2, (B, Cc, H, W)) > 0.5).astype(jnp.float32)

    dice = jax.block_until_ready(hard_dice_coef(inputs, target))
    ref = jax.block_until_ready(_reference_hard_dice(inputs, target))
    assert jnp.allclose(dice, ref, atol=1e-5, rtol=1e-5), (dice, ref)

    # Case 2: class_id selection.
    dice_c = jax.block_until_ready(hard_dice_coef(inputs, target, class_id=1))
    ref_c = jax.block_until_ready(
        _reference_hard_dice(inputs, target, class_id=1))
    assert jnp.allclose(dice_c, ref_c, atol=1e-5, rtol=1e-5), (dice_c, ref_c)

    # Case 3: ragged feature tail + multi-chunk grid (exercises the in-kernel
    # lane mask and the clamped index map).
    inputs3 = jax.random.normal(k3, (2, 5, 16, 16), dtype=jnp.float32)
    target3 = (jax.random.uniform(k4, (2, 5, 16, 16)) > 0.5).astype(jnp.float32)
    dice3 = jax.block_until_ready(
        hard_dice_coef(inputs3, target3, tile_n=128, num_chunks=2))
    ref3 = jax.block_until_ready(_reference_hard_dice(inputs3, target3))
    assert jnp.allclose(dice3, ref3, atol=1e-5, rtol=1e-5), (dice3, ref3)

    print("KERNEL_OK")
</pallas_src>

<mosaic_0001>
module attributes {stable_mosaic.version = 11 : i64} {
  func.func @_hard_dice_kernel(%arg0: i32, %arg1: i32, %arg2: memref<8x256xf32, #tpu.memory_space<vmem>>, %arg3: memref<8x256xf32, #tpu.memory_space<vmem>>, %arg4: memref<1x8x1xf32, #tpu.memory_space<vmem>>, %arg5: memref<1x8x1xf32, #tpu.memory_space<vmem>>) attributes {dimension_semantics = [#tpu.dimension_semantics<parallel>, #tpu.dimension_semantics<arbitrary>], iteration_bounds = array<i64: 1, 1>, scalar_prefetch = 0 : i64, scratch_operands = 0 : i64, tpu.core_type = #tpu.core_type<tc>, window_params = [{transform_indices = @transform_0, window_bounds = array<i64: 8, 256>}, {transform_indices = @transform_1, window_bounds = array<i64: 8, 256>}, {transform_indices = @transform_2, window_bounds = array<i64: 1, 8, 1>}, {transform_indices = @transform_3, window_bounds = array<i64: 1, 8, 1>}]} {
    %c0_i32 = arith.constant 0 : i32
    %0 = arith.cmpi eq, %arg1, %c0_i32 : i32
    %1 = arith.extui %0 : i1 to i32
    %c0_i32_0 = arith.constant 0 : i32
    %2 = arith.cmpi ne, %1, %c0_i32_0 : i32
    scf.if %2 {
      %cst_18 = arith.constant 0.000000e+00 : f32
      %27 = vector.broadcast %cst_18 : f32 to vector<8x1xf32>
      %c0_19 = arith.constant 0 : index
      %c0_20 = arith.constant 0 : index
      %c0_21 = arith.constant 0 : index
      %28 = vector.load %arg4[%c0_19, %c0_20, %c0_21] : memref<1x8x1xf32, #tpu.memory_space<vmem>>, vector<1x8x1xf32>
      %29 = vector.shape_cast %28 : vector<1x8x1xf32> to vector<8x1xf32>
      %30 = vector.shape_cast %27 : vector<8x1xf32> to vector<1x8x1xf32>
      tpu.vector_store %arg4[%c0_19, %c0_20, %c0_21], %30 {strides = array<i32>} : memref<1x8x1xf32, #tpu.memory_space<vmem>>, vector<1x8x1xf32>,
      %cst_22 = arith.constant 0.000000e+00 : f32
      %31 = vector.broadcast %cst_22 : f32 to vector<8x1xf32>
      %c0_23 = arith.constant 0 : index
      %c0_24 = arith.constant 0 : index
      %c0_25 = arith.constant 0 : index
      %32 = vector.load %arg5[%c0_23, %c0_24, %c0_25] : memref<1x8x1xf32, #tpu.memory_space<vmem>>, vector<1x8x1xf32>
      %33 = vector.shape_cast %32 : vector<1x8x1xf32> to vector<8x1xf32>
      %34 = vector.shape_cast %31 : vector<8x1xf32> to vector<1x8x1xf32>
      tpu.vector_store %arg5[%c0_23, %c0_24, %c0_25], %34 {strides = array<i32>} : memref<1x8x1xf32, #tpu.memory_space<vmem>>, vector<1x8x1xf32>,
    } else {
    }
    %c0 = arith.constant 0 : index
    %c0_1 = arith.constant 0 : index
    %3 = vector.load %arg2[%c0, %c0_1] : memref<8x256xf32, #tpu.memory_space<vmem>>, vector<8x256xf32>
    %c0_2 = arith.constant 0 : index
    %c0_3 = arith.constant 0 : index
    %4 = vector.load %arg3[%c0_2, %c0_3] : memref<8x256xf32, #tpu.memory_space<vmem>>, vector<8x256xf32>
    %cst = arith.constant 0.000000e+00 : f32
    %5 = vector.broadcast %cst : f32 to vector<8x256xf32>
    %6 = arith.cmpf ogt, %3, %5 : vector<8x256xf32>
    %7 = arith.extui %6 : vector<8x256xi1> to vector<8x256xi32>
    %8 = arith.sitofp %7 : vector<8x256xi32> to vector<8x256xf32>
    %c0_4 = arith.constant 0 : index
    %c0_5 = arith.constant 0 : index
    %c0_6 = arith.constant 0 : index
    %9 = vector.load %arg4[%c0_4, %c0_5, %c0_6] : memref<1x8x1xf32, #tpu.memory_space<vmem>>, vector<1x8x1xf32>
    %10 = vector.shape_cast %9 : vector<1x8x1xf32> to vector<8x1xf32>
    %11 = arith.mulf %8, %4 : vector<8x256xf32>
    %cst_7 = arith.constant dense<0.000000e+00> : vector<8xf32>
    %12 = vector.multi_reduction <add>, %11, %cst_7 [1] : vector<8x256xf32> to vector<8xf32>
    %13 = vector.shape_cast %12 : vector<8xf32> to vector<8x1xf32>
    %14 = arith.addf %10, %13 : vector<8x1xf32>
    %c0_8 = arith.constant 0 : index
    %c0_9 = arith.constant 0 : index
    %c0_10 = arith.constant 0 : index
    %15 = vector.load %arg4[%c0_8, %c0_9, %c0_10] : memref<1x8x1xf32, #tpu.memory_space<vmem>>, vector<1x8x1xf32>
    %16 = vector.shape_cast %15 : vector<1x8x1xf32> to vector<8x1xf32>
    %17 = vector.shape_cast %14 : vector<8x1xf32> to vector<1x8x1xf32>
    tpu.vector_store %arg4[%c0_8, %c0_9, %c0_10], %17 {strides = array<i32>} : memref<1x8x1xf32, #tpu.memory_space<vmem>>, vector<1x8x1xf32>,
    %c0_11 = arith.constant 0 : index
    %c0_12 = arith.constant 0 : index
    %c0_13 = arith.constant 0 : index
    %18 = vector.load %arg5[%c0_11, %c0_12, %c0_13] : memref<1x8x1xf32, #tpu.memory_space<vmem>>, vector<1x8x1xf32>
    %19 = vector.shape_cast %18 : vector<1x8x1xf32> to vector<8x1xf32>
    %20 = arith.addf %8, %4 : vector<8x256xf32>
    %cst_14 = arith.constant dense<0.000000e+00> : vector<8xf32>
    %21 = vector.multi_reduction <add>, %20, %cst_14 [1] : vector<8x256xf32> to vector<8xf32>
    %22 = vector.shape_cast %21 : vector<8xf32> to vector<8x1xf32>
    %23 = arith.addf %19, %22 : vector<8x1xf32>
    %c0_15 = arith.constant 0 : index
    %c0_16 = arith.constant 0 : index
    %c0_17 = arith.constant 0 : index
    %24 = vector.load %arg5[%c0_15, %c0_16, %c0_17] : memref<1x8x1xf32, #tpu.memory_space<vmem>>, vector<1x8x1xf32>
    %25 = vector.shape_cast %24 : vector<1x8x1xf32> to vector<8x1xf32>
    %26 = vector.shape_cast %23 : vector<8x1xf32> to vector<1x8x1xf32>
    tpu.vector_store %arg5[%c0_15, %c0_16, %c0_17], %26 {strides = array<i32>} : memref<1x8x1xf32, #tpu.memory_space<vmem>>, vector<1x8x1xf32>,
    return
  }
  func.func @transform_0(%arg0: i32, %arg1: i32) -> (i32, i32) {
    %c1_i32 = arith.constant 1 : i32
    %0 = arith.muli %arg0, %c1_i32 : i32
    %1 = arith.addi %0, %arg1 : i32
    %c0_i32 = arith.constant 0 : i32
    %2 = arith.minsi %1, %c0_i32 : i32
    %c0_i32_0 = arith.constant 0 : i32
    %c0_i32_1 = arith.constant 0 : i32
    return %c0_i32_0, %2 : i32, i32
  }
  func.func @transform_1(%arg0: i32, %arg1: i32) -> (i32, i32) {
    %c1_i32 = arith.constant 1 : i32
    %0 = arith.muli %arg0, %c1_i32 : i32
    %1 = arith.addi %0, %arg1 : i32
    %c0_i32 = arith.constant 0 : i32
    %2 = arith.minsi %1, %c0_i32 : i32
    %c0_i32_0 = arith.constant 0 : i32
    %c0_i32_1 = arith.constant 0 : i32
    return %c0_i32_0, %2 : i32, i32
  }
  func.func @transform_2(%arg0: i32, %arg1: i32) -> (i32, i32, i32) {
    %c0_i32 = arith.constant 0 : i32
    %c0_i32_0 = arith.constant 0 : i32
    %c0_i32_1 = arith.constant 0 : i32
    return %arg0, %c0_i32, %c0_i32_0 : i32, i32, i32
  }
  func.func @transform_3(%arg0: i32, %arg1: i32) -> (i32, i32, i32) {
    %c0_i32 = arith.constant 0 : i32
    %c0_i32_0 = arith.constant 0 : i32
    %c0_i32_1 = arith.constant 0 : i32
    return %arg0, %c0_i32, %c0_i32_0 : i32, i32, i32
  }
}

</mosaic_0001>

<llo_original>
// kernel: tpu_custom_call.1
$region0: #{tpu_custom_call.1}
  #allocation0 [shape = 'u32[]', space=smem, size = 0x4, offset = 0x4, fixed_abs, tag = 'smem constant byte address 0x4 - core index']
  #allocation1 [shape = 'u32[72,128]{1,0:T(1,128)}', space=vmem, size = 0x9000, scoped, tag = 'internal scratch']
  %s0 = inlined_call_operand.hbm [shape: f32[8,256], index: 0, kind: input, shape index: {}]
  %s1 = inlined_call_operand.hbm [shape: f32[8,256], index: 1, kind: input, shape index: {}]
  %s2 = inlined_call_operand.vmem [shape: f32[1,8,1], index: 2, kind: output, shape index: {0}]
  %s3 = inlined_call_operand.vmem [shape: f32[1,8,1], index: 3, kind: output, shape index: {1}]
  %4 = xla_tuple %s2, %s3
  %s5 = sld [smem:[#allocation0]]
  $region38: #{tpu_custom_call.1} parent=0
    _
  %s7 = ssub.s32 1, %s5
  %s8 = scalar_select 0, %s7, %s5
  $region1: #{tpu_custom_call.1} parent=0
    #allocation2 [shape = 'u8[8192]{0}', space=vmem, size = 0x2000, scoped, tag = 'input window, operand 0, single buffered']
    #allocation3 [shape = 's32[1]{0}', space=sflag, size = 0x4, scoped, tag = 'scoped memory for tpu_custom_call.1']
    #allocation4 [shape = 'u8[8192]{0}', space=vmem, size = 0x2000, scoped, tag = 'input window, operand 1, single buffered']
    #allocation5 [shape = 's32[1]{0}', space=sflag, size = 0x4, scoped, tag = 'scoped memory for tpu_custom_call.1']
    %9 = vsyncpa [#allocation3], 0
    %10 = vsyncpa [#allocation5], 0
    // Predicated region
    $region2: #{tpu_custom_call.1} parent=1 // pred_check
      _
    $region3: #{tpu_custom_call.1} parent=1 // pred_check_branch
      %12 = sbr.rel (0) target = $region5
    $region4: #{tpu_custom_call.1} parent=1 // pred_region
      %s13 = sadd.s32 0, 0
      %p14 = scmp.lt.s32.totalorder %s13, 0
      %s15 = scalar_select %p14, %s13, 0
      %s16 = smul.u32 2, %s15
      %18 = vsyncadd [#allocation3], 0
      %s19 = smul.addr %s16, 8
      %s20 = scalar_lea.hbm %s0, %s19
      %s22 = sshll.u32 %s20, 4
      %s23 = int_to_ptr.hbm [resolvable:$true] %s22
      %s24 = sshll.u32 [#allocation2], 4
      %s25 = int_to_ptr.vmem [resolvable:$true] %s24
      %27 = dma.hbm_to_vmem [thread:$0]  %s23, 256, %s25, [#allocation3]
    $region5: #{tpu_custom_call.1} parent=1 // pred_fallthru
      _
    // Predicated region
    $region6: #{tpu_custom_call.1} parent=1 // pred_check
      _
    $region7: #{tpu_custom_call.1} parent=1 // pred_check_branch
      %29 = sbr.rel (0) target = $region9
    $region8: #{tpu_custom_call.1} parent=1 // pred_region
      %s30 = sadd.s32 0, 0
      %p31 = scmp.lt.s32.totalorder %s30, 0
      %s32 = scalar_select %p31, %s30, 0
      %s33 = smul.u32 2, %s32
      %35 = vsyncadd [#allocation5], 0
      %s36 = smul.addr %s33, 8
      %s37 = scalar_lea.hbm %s1, %s36
      %s39 = sshll.u32 %s37, 4
      %s40 = int_to_ptr.hbm [resolvable:$true] %s39
      %s41 = sshll.u32 [#allocation4], 4
      %s42 = int_to_ptr.vmem [resolvable:$true] %s41
      %44 = dma.hbm_to_vmem [thread:$0]  %s40, 256, %s42, [#allocation5]
    $region9: #{tpu_custom_call.1} parent=1 // pred_fallthru
      _
    // Predicated region
    $region10: #{tpu_custom_call.1} parent=1 // pred_check
      _
    $region11: #{tpu_custom_call.1} parent=1 // pred_check_branch
      %46 = sbr.rel (0) target = $region13
    $region12: #{tpu_custom_call.1} parent=1 // pred_region
      %48 = dma.done [#allocation3], 256
    $region13: #{tpu_custom_call.1} parent=1 // pred_fallthru
      _
    // Predicated region
    $region14: #{tpu_custom_call.1} parent=1 // pred_check
      _
    $region15: #{tpu_custom_call.1} parent=1 // pred_check_branch
      %50 = sbr.rel (0) target = $region17
    $region16: #{tpu_custom_call.1} parent=1 // pred_region
      %52 = dma.done [#allocation5], 256
    $region17: #{tpu_custom_call.1} parent=1 // pred_fallthru
      _
    %s53 = sadd.s32 0, 0
    %p54 = scmp.lt.s32.totalorder %s53, 0
    %s55 = scalar_select %p54, %s53, 0
    %s56 = smul.u32 2, %s55
    %s57 = sadd.s32 0, 0
    %p58 = scmp.lt.s32.totalorder %s57, 0
    %s59 = scalar_select %p58, %s57, 0
    %s60 = smul.u32 2, %s59
    %p61 = scmp.eq.s32.totalorder 0, 0
    // Predicated region
    $region18: #{tpu_custom_call.1} parent=1 // pred_check
      %p62 = pneg %p61
    $region19: #{tpu_custom_call.1} parent=1 // pred_check_branch
      %64 = sbr.rel (%p62) target = $region21
    $region20: #{tpu_custom_call.1} parent=1 // pred_region
      %vm65 = vcmask 7168
      %66 = vst.msk [vmem:[%s2] sm:$0xff] %vm65, 0.0
      %67 = vst.msk [vmem:[%s3] sm:$0xff] %vm65, 0.0
    $region21: #{tpu_custom_call.1} parent=1 // pred_fallthru
      _
    %v68 = vld [vmem:[#allocation2] sm:$0xff]
    %v69 = vld [vmem:[#allocation2 + $0x8] sm:$0xff]
    %v70 = vld [vmem:[#allocation4] sm:$0xff]
    %v71 = vld [vmem:[#allocation4 + $0x8] sm:$0xff]
    %vm72 = vcmp.gt.f32.partialorder %v68, 0.0
    %vm73 = vcmp.gt.f32.partialorder %v69, 0.0
    %v74 = vsel %vm72, 1, 0
    %v75 = vsel %vm73, 1, 0
    %v76 = vcvt.s32.f32 %v74
    %v77 = vcvt.s32.f32 %v75
    %v78 = vld [vmem:[%s2] sm:$0xff]
    %v79 = vmul.f32 %v76, %v70
    %v80 = vmul.f32 %v77, %v71
    %v81 = vadd.f32 %v79, %v80
    %82 = vadd.xlane.f32.xlu0 %v81
    %v83 = vpop.xlane.xlu0 %82
    %v84 = vadd.f32 %v78, %v83
    %vm85 = vcmask 7168
    %86 = vst.msk [vmem:[%s2] sm:$0xff] %vm85, %v84
    %v87 = vld [vmem:[%s3] sm:$0xff]
    %v88 = vadd.f32 %v76, %v70
    %v89 = vadd.f32 %v77, %v71
    %v90 = vadd.f32 %v88, %v89
    %91 = vadd.xlane.f32.xlu0 %v90
    %v92 = vpop.xlane.xlu0 %91
    %v93 = vadd.f32 %v87, %v92
    %94 = vst.msk [vmem:[%s3] sm:$0xff] %vm85, %v93
    // Predicated region
    $region22: #{tpu_custom_call.1} parent=1 // pred_check
      _
    $region23: #{tpu_custom_call.1} parent=1 // pred_check_branch
      %96 = sbr.rel (0) target = $region25
    $region24: #{tpu_custom_call.1} parent=1 // pred_region
      _
    $region25: #{tpu_custom_call.1} parent=1 // pred_fallthru
      _
    // Predicated region
    $region26: #{tpu_custom_call.1} parent=1 // pred_check
      _
    $region27: #{tpu_custom_call.1} parent=1 // pred_check_branch
      %98 = sbr.rel (0) target = $region29
    $region28: #{tpu_custom_call.1} parent=1 // pred_region
      _
    $region29: #{tpu_custom_call.1} parent=1 // pred_fallthru
      _
    // Predicated region
    $region30: #{tpu_custom_call.1} parent=1 // pred_check
      _
    $region31: #{tpu_custom_call.1} parent=1 // pred_check_branch
      %100 = sbr.rel (0) target = $region33
    $region32: #{tpu_custom_call.1} parent=1 // pred_region
      _
    $region33: #{tpu_custom_call.1} parent=1 // pred_fallthru
      _
    // Predicated region
    $region34: #{tpu_custom_call.1} parent=1 // pred_check
      _
    $region35: #{tpu_custom_call.1} parent=1 // pred_check_branch
      %102 = sbr.rel (0) target = $region37
    $region36: #{tpu_custom_call.1} parent=1 // pred_region
      _
    $region37: #{tpu_custom_call.1} parent=1 // pred_fallthru
      _
    %103 = vsyncpa [#allocation3], 1
    %104 = vsyncpa [#allocation5], 1

</llo_original>
